<compile_context>
chip_gen: v5e
topology: v5e:2x2
jax: 0.10.0
libtpu: 0.0.40
codegen_flags: <defaults>
</compile_context>

<pallas_src>
import jax
import jax.numpy as jnp
from jax.experimental import pallas as pl
from jax.experimental.pallas import tpu as pltpu


def _round_up(n, m):
    return pl.cdiv(n, m) * m


def mlp_kernel(x_ref, w1_ref, b1_ref, w2_ref, b2_ref, w3_ref, b3_ref, o_ref):
    # x tile: (TILE_B, 13) f32 -> cast to bf16 in-kernel (no extra HBM pass).
    x = x_ref[...].astype(jnp.bfloat16)
    # fc1 + relu (f32 accumulate, f32 bias/ReLU)
    h1 = jnp.dot(x, w1_ref[...], preferred_element_type=jnp.float32) + b1_ref[...]
    h1 = jnp.maximum(h1, 0.0)
    # fc2 + relu
    h2 = jnp.dot(h1.astype(jnp.bfloat16), w2_ref[...],
                 preferred_element_type=jnp.float32) + b2_ref[...]
    h2 = jnp.maximum(h2, 0.0)
    # fc3 (no activation); garbage rows of a ragged edge tile are masked off
    # by Pallas on writeback, so they never reach HBM.
    o_ref[...] = jnp.dot(h2.astype(jnp.bfloat16), w3_ref[...],
                         preferred_element_type=jnp.float32) + b3_ref[...]


def neuro_network_forward(x, params, *, tile_b=8192,
                          vmem_limit_bytes=48 * 1024 * 1024):
    """x: (B, 13) float32 -> (B, 2) float32."""
    w1, b1, w2, b2, w3, b3 = params
    B = x.shape[0]

    # Tile: multiple of 16 (bf16 sublane packing), never larger than needed.
    tile_b = int(min(tile_b, _round_up(max(B, 16), 16)))
    tile_b = int(_round_up(tile_b, 16))

    num_tiles = int(pl.cdiv(B, tile_b))
    # v7x has 2 TensorCores: keep the parallel grid length even when > 1 so
    # both cores get a balanced share of tiles.
    if num_tiles > 1 and num_tiles % 2 == 1:
        num_tiles += 1
        tile_b = int(_round_up(pl.cdiv(B, num_tiles), 16))
        num_tiles = int(pl.cdiv(B, tile_b))

    # Weights cast to bf16 once (tiny: ~5K params, negligible); biases stay f32.
    w1_bf = w1.astype(jnp.bfloat16)
    w2_bf = w2.astype(jnp.bfloat16)
    w3_bf = w3.astype(jnp.bfloat16)

    out = pl.pallas_call(
        mlp_kernel,
        out_shape=jax.ShapeDtypeStruct((B, 2), jnp.float32),
        grid_spec=pltpu.PrefetchScalarGridSpec(
            num_scalar_prefetch=0,
            grid=(num_tiles,),
            in_specs=[
                # streamed batch tiles (f32, ragged last tile handled by Pallas)
                pl.BlockSpec((tile_b, 13), lambda i: (i, 0)),
                # weights / biases: constant index_map -> resident in VMEM
                pl.BlockSpec((13, 64), lambda i: (0, 0)),
                pl.BlockSpec((1, 64), lambda i: (0, 0)),
                pl.BlockSpec((64, 64), lambda i: (0, 0)),
                pl.BlockSpec((1, 64), lambda i: (0, 0)),
                pl.BlockSpec((64, 2), lambda i: (0, 0)),
                pl.BlockSpec((1, 2), lambda i: (0, 0)),
            ],
            out_specs=pl.BlockSpec((tile_b, 2), lambda i: (i, 0)),
        ),
        compiler_params=pltpu.CompilerParams(
            dimension_semantics=("parallel",),     # megacore sharding on v7x
            vmem_limit_bytes=int(vmem_limit_bytes),
        ),
    )(x, w1_bf, b1, w2_bf, b2, w3_bf, b3)

    return out


def init_params(key):
    """Deterministic init matching torch Linear shapes.

    Weights stored as (in_features, out_features); biases as (1, out)."""
    k1, k2, k3, k4, k5, k6 = jax.random.split(key, 6)

    def uniform(k, shape, fan_in):
        bound = 1.0 / jnp.sqrt(fan_in)
        return jax.random.uniform(k, shape, jnp.float32, -bound, bound)

    w1 = uniform(k1, (13, 64), 13.0)
    b1 = uniform(k2, (1, 64), 13.0)
    w2 = uniform(k3, (64, 64), 64.0)
    b2 = uniform(k4, (1, 64), 64.0)
    w3 = uniform(k5, (64, 2), 64.0)
    b3 = uniform(k6, (1, 2), 64.0)
    return (w1, b1, w2, b2, w3, b3)


def reference_forward_bf16(x, params):
    """Pure-JAX reference mirroring the kernel's bf16-input / f32-acc math."""
    w1, b1, w2, b2, w3, b3 = params
    xb = x.astype(jnp.bfloat16)
    h1 = jnp.dot(xb, w1.astype(jnp.bfloat16),
                 preferred_element_type=jnp.float32) + b1
    h1 = jnp.maximum(h1, 0.0)
    h2 = jnp.dot(h1.astype(jnp.bfloat16), w2.astype(jnp.bfloat16),
                 preferred_element_type=jnp.float32) + b2
    h2 = jnp.maximum(h2, 0.0)
    return jnp.dot(h2.astype(jnp.bfloat16), w3.astype(jnp.bfloat16),
                   preferred_element_type=jnp.float32) + b3


def reference_forward_f32(x, params):
    """Pure-f32 reference matching the original PyTorch module's math."""
    w1, b1, w2, b2, w3, b3 = params
    h1 = jnp.maximum(x @ w1 + b1, 0.0)
    h2 = jnp.maximum(h1 @ w2 + b2, 0.0)
    return h2 @ w3 + b3


if __name__ == "__main__":
    key = jax.random.PRNGKey(0)
    kp, kx1, kx2, kx3 = jax.random.split(key, 4)
    params = init_params(kp)

    # Small exact-tile case (B = 8).
    x1 = jax.random.normal(kx1, (8, 13), jnp.float32)
    o1 = jax.block_until_ready(neuro_network_forward(x1, params))
    assert o1.shape == (8, 2)
    assert jnp.allclose(o1, reference_forward_bf16(x1, params), atol=1e-4, rtol=1e-4)
    # Loose check against the true f32 (torch-equivalent) math.
    assert jnp.allclose(o1, reference_forward_f32(x1, params), atol=1e-1, rtol=1e-1)

    # Multi-tile + ragged-edge path (grid=2, last block partially masked).
    x2 = jax.random.normal(kx2, (100, 13), jnp.float32)
    o2 = jax.block_until_ready(neuro_network_forward(x2, params, tile_b=64))
    assert o2.shape == (100, 2)
    assert jnp.allclose(o2, reference_forward_bf16(x2, params), atol=1e-4, rtol=1e-4)

    # Default-tile path with a batch that is not a multiple of the tile.
    x3 = jax.random.normal(kx3, (2500, 13), jnp.float32)
    o3 = jax.block_until_ready(neuro_network_forward(x3, params))
    assert o3.shape == (2500, 2)
    assert jnp.allclose(o3, reference_forward_bf16(x3, params), atol=1e-4, rtol=1e-4)

    print("KERNEL_OK")
</pallas_src>

<mosaic_0001>
module attributes {stable_mosaic.version = 11 : i64} {
  func.func @mlp_kernel(%arg0: i32, %arg1: memref<16x13xf32, #tpu.memory_space<vmem>>, %arg2: memref<13x64xbf16, #tpu.memory_space<vmem>>, %arg3: memref<1x64xf32, #tpu.memory_space<vmem>>, %arg4: memref<64x64xbf16, #tpu.memory_space<vmem>>, %arg5: memref<1x64xf32, #tpu.memory_space<vmem>>, %arg6: memref<64x2xbf16, #tpu.memory_space<vmem>>, %arg7: memref<1x2xf32, #tpu.memory_space<vmem>>, %arg8: memref<16x2xf32, #tpu.memory_space<vmem>>) attributes {dimension_semantics = [#tpu.dimension_semantics<parallel>], iteration_bounds = array<i64: 1>, scalar_prefetch = 0 : i64, scratch_operands = 0 : i64, tpu.core_type = #tpu.core_type<tc>, window_params = [{transform_indices = @transform_0, window_bounds = array<i64: 16, 13>}, {pipeline_mode = #tpu.pipeline_mode<synchronous>, transform_indices = @transform_1, window_bounds = array<i64: 13, 64>}, {pipeline_mode = #tpu.pipeline_mode<synchronous>, transform_indices = @transform_2, window_bounds = array<i64: 1, 64>}, {pipeline_mode = #tpu.pipeline_mode<synchronous>, transform_indices = @transform_3, window_bounds = array<i64: 64, 64>}, {pipeline_mode = #tpu.pipeline_mode<synchronous>, transform_indices = @transform_4, window_bounds = array<i64: 1, 64>}, {pipeline_mode = #tpu.pipeline_mode<synchronous>, transform_indices = @transform_5, window_bounds = array<i64: 64, 2>}, {pipeline_mode = #tpu.pipeline_mode<synchronous>, transform_indices = @transform_6, window_bounds = array<i64: 1, 2>}, {transform_indices = @transform_7, window_bounds = array<i64: 16, 2>}]} {
    %c0 = arith.constant 0 : index
    %c0_0 = arith.constant 0 : index
    %0 = vector.load %arg1[%c0, %c0_0] : memref<16x13xf32, #tpu.memory_space<vmem>>, vector<16x13xf32>
    %1 = arith.truncf %0 : vector<16x13xf32> to vector<16x13xbf16>
    %c0_1 = arith.constant 0 : index
    %c0_2 = arith.constant 0 : index
    %2 = vector.load %arg2[%c0_1, %c0_2] : memref<13x64xbf16, #tpu.memory_space<vmem>>, vector<13x64xbf16>
    %cst = arith.constant dense<0.000000e+00> : vector<16x64xf32>
    %3 = tpu.matmul %1, %2, %cst {dimension_numbers = #tpu.dot_dimension_numbers<[1], [0], [0], [1], [0, 0, 1, 1], [], []>} : vector<16x13xbf16>, vector<13x64xbf16>, vector<16x64xf32> -> vector<16x64xf32>
    %c0_3 = arith.constant 0 : index
    %c0_4 = arith.constant 0 : index
    %4 = vector.load %arg3[%c0_3, %c0_4] : memref<1x64xf32, #tpu.memory_space<vmem>>, vector<1x64xf32>
    %5 = vector.broadcast %4 : vector<1x64xf32> to vector<16x64xf32>
    %6 = arith.addf %3, %5 : vector<16x64xf32>
    %cst_5 = arith.constant 0.000000e+00 : f32
    %7 = vector.broadcast %cst_5 : f32 to vector<16x64xf32>
    %8 = arith.maximumf %6, %7 : vector<16x64xf32>
    %9 = arith.truncf %8 : vector<16x64xf32> to vector<16x64xbf16>
    %c0_6 = arith.constant 0 : index
    %c0_7 = arith.constant 0 : index
    %10 = vector.load %arg4[%c0_6, %c0_7] : memref<64x64xbf16, #tpu.memory_space<vmem>>, vector<64x64xbf16>
    %cst_8 = arith.constant dense<0.000000e+00> : vector<16x64xf32>
    %11 = tpu.matmul %9, %10, %cst_8 {dimension_numbers = #tpu.dot_dimension_numbers<[1], [0], [0], [1], [0, 0, 1, 1], [], []>} : vector<16x64xbf16>, vector<64x64xbf16>, vector<16x64xf32> -> vector<16x64xf32>
    %c0_9 = arith.constant 0 : index
    %c0_10 = arith.constant 0 : index
    %12 = vector.load %arg5[%c0_9, %c0_10] : memref<1x64xf32, #tpu.memory_space<vmem>>, vector<1x64xf32>
    %13 = vector.broadcast %12 : vector<1x64xf32> to vector<16x64xf32>
    %14 = arith.addf %11, %13 : vector<16x64xf32>
    %cst_11 = arith.constant 0.000000e+00 : f32
    %15 = vector.broadcast %cst_11 : f32 to vector<16x64xf32>
    %16 = arith.maximumf %14, %15 : vector<16x64xf32>
    %17 = arith.truncf %16 : vector<16x64xf32> to vector<16x64xbf16>
    %c0_12 = arith.constant 0 : index
    %c0_13 = arith.constant 0 : index
    %18 = vector.load %arg6[%c0_12, %c0_13] : memref<64x2xbf16, #tpu.memory_space<vmem>>, vector<64x2xbf16>
    %cst_14 = arith.constant dense<0.000000e+00> : vector<16x2xf32>
    %19 = tpu.matmul %17, %18, %cst_14 {dimension_numbers = #tpu.dot_dimension_numbers<[1], [0], [0], [1], [0, 0, 1, 1], [], []>} : vector<16x64xbf16>, vector<64x2xbf16>, vector<16x2xf32> -> vector<16x2xf32>
    %c0_15 = arith.constant 0 : index
    %c0_16 = arith.constant 0 : index
    %20 = vector.load %arg7[%c0_15, %c0_16] : memref<1x2xf32, #tpu.memory_space<vmem>>, vector<1x2xf32>
    %21 = vector.broadcast %20 : vector<1x2xf32> to vector<16x2xf32>
    %22 = arith.addf %19, %21 : vector<16x2xf32>
    %c0_17 = arith.constant 0 : index
    %c0_18 = arith.constant 0 : index
    %23 = vector.load %arg8[%c0_17, %c0_18] : memref<16x2xf32, #tpu.memory_space<vmem>>, vector<16x2xf32>
    tpu.vector_store %arg8[%c0_17, %c0_18], %22 {strides = array<i32>} : memref<16x2xf32, #tpu.memory_space<vmem>>, vector<16x2xf32>,
    return
  }
  func.func @transform_0(%arg0: i32) -> (i32, i32) {
    %c0_i32 = arith.constant 0 : i32
    %c0_i32_0 = arith.constant 0 : i32
    return %arg0, %c0_i32 : i32, i32
  }
  func.func @transform_1(%arg0: i32) -> (i32, i32) {
    %c0_i32 = arith.constant 0 : i32
    %c0_i32_0 = arith.constant 0 : i32
    %c0_i32_1 = arith.constant 0 : i32
    return %c0_i32, %c0_i32_0 : i32, i32
  }
  func.func @transform_2(%arg0: i32) -> (i32, i32) {
    %c0_i32 = arith.constant 0 : i32
    %c0_i32_0 = arith.constant 0 : i32
    %c0_i32_1 = arith.constant 0 : i32
    return %c0_i32, %c0_i32_0 : i32, i32
  }
  func.func @transform_3(%arg0: i32) -> (i32, i32) {
    %c0_i32 = arith.constant 0 : i32
    %c0_i32_0 = arith.constant 0 : i32
    %c0_i32_1 = arith.constant 0 : i32
    return %c0_i32, %c0_i32_0 : i32, i32
  }
  func.func @transform_4(%arg0: i32) -> (i32, i32) {
    %c0_i32 = arith.constant 0 : i32
    %c0_i32_0 = arith.constant 0 : i32
    %c0_i32_1 = arith.constant 0 : i32
    return %c0_i32, %c0_i32_0 : i32, i32
  }
  func.func @transform_5(%arg0: i32) -> (i32, i32) {
    %c0_i32 = arith.constant 0 : i32
    %c0_i32_0 = arith.constant 0 : i32
    %c0_i32_1 = arith.constant 0 : i32
    return %c0_i32, %c0_i32_0 : i32, i32
  }
  func.func @transform_6(%arg0: i32) -> (i32, i32) {
    %c0_i32 = arith.constant 0 : i32
    %c0_i32_0 = arith.constant 0 : i32
    %c0_i32_1 = arith.constant 0 : i32
    return %c0_i32, %c0_i32_0 : i32, i32
  }
  func.func @transform_7(%arg0: i32) -> (i32, i32) {
    %c0_i32 = arith.constant 0 : i32
    %c0_i32_0 = arith.constant 0 : i32
    return %arg0, %c0_i32 : i32, i32
  }
}

</mosaic_0001>

<llo_original>
// kernel: tpu_custom_call.1
$region0: #{tpu_custom_call.1}
  #allocation0 [shape = 'u32[]', space=smem, size = 0x4, offset = 0x4, fixed_abs, tag = 'smem constant byte address 0x4 - core index']
  #allocation1 [shape = 'u32[72,128]{1,0:T(1,128)}', space=vmem, size = 0x9000, scoped, tag = 'internal scratch']
  %s0 = inlined_call_operand.hbm [shape: f32[8,13], index: 0, kind: input, shape index: {}]
  %s1 = inlined_call_operand.hbm [shape: bf16[13,64], index: 1, kind: input, shape index: {}]
  %s2 = inlined_call_operand.vmem [shape: f32[1,64], index: 2, kind: input, shape index: {}]
  %s3 = inlined_call_operand.vmem [shape: bf16[64,64], index: 3, kind: input, shape index: {}]
  %s4 = inlined_call_operand.vmem [shape: f32[1,64], index: 4, kind: input, shape index: {}]
  %s5 = inlined_call_operand.vmem [shape: bf16[64,2], index: 5, kind: input, shape index: {}]
  %s6 = inlined_call_operand.vmem [shape: f32[1,2], index: 6, kind: input, shape index: {}]
  %s7 = inlined_call_operand.vmem [shape: f32[8,2], index: 7, kind: output, shape index: {}]
  %s8 = sld [smem:[#allocation0]]
  $region80: #{tpu_custom_call.1} parent=0
    _
  %s10 = ssub.s32 1, %s8
  %s11 = scalar_select 0, %s10, %s8
  $region1: #{tpu_custom_call.1} parent=0
    #allocation2 [shape = 'u8[8192]{0}', space=vmem, size = 0x2000, scoped, tag = 'input window, operand 0, single buffered']
    #allocation3 [shape = 's32[1]{0}', space=sflag, size = 0x4, scoped, tag = 'scoped memory for tpu_custom_call.1']
    #allocation4 [shape = 'u8[4096]{0}', space=vmem, size = 0x1000, scoped, tag = 'input window, operand 1, single buffered']
    #allocation5 [shape = 's32[1]{0}', space=sflag, size = 0x4, scoped, tag = 'scoped memory for tpu_custom_call.1']
    #allocation6 [shape = 'u8[8192]{0}', space=vmem, size = 0x2000, scoped, tag = 'output window, operand 0, single buffered']
    %12 = vsyncpa [#allocation3], 0
    %13 = vsyncpa [#allocation5], 0
    // Predicated region
    $region2: #{tpu_custom_call.1} parent=1 // pred_check
      _
    $region3: #{tpu_custom_call.1} parent=1 // pred_check_branch
      %15 = sbr.rel (0) target = $region5
    $region4: #{tpu_custom_call.1} parent=1 // pred_region
      %17 = vsyncadd [#allocation3], 128
      %s18 = sshll.u32 %s0, 4
      %s19 = int_to_ptr.hbm [resolvable:$true] %s18
      %s20 = sshll.u32 [#allocation2], 4
      %s21 = int_to_ptr.vmem [resolvable:$true] %s20
      %26 = dma.hbm_to_vmem [thread:$0]  %s19, 128, %s21, [#allocation3], 128, 128, 8
    $region5: #{tpu_custom_call.1} parent=1 // pred_fallthru
      _
    // Predicated region
    $region6: #{tpu_custom_call.1} parent=1 // pred_check
      _
    $region7: #{tpu_custom_call.1} parent=1 // pred_check_branch
      %28 = sbr.rel (0) target = $region9
    $region8: #{tpu_custom_call.1} parent=1 // pred_region
      %30 = vsyncadd [#allocation5], 0
      %s31 = sshll.u32 %s1, 4
      %s32 = int_to_ptr.hbm [resolvable:$true] %s31
      %s33 = sshll.u32 [#allocation4], 4
      %s34 = int_to_ptr.vmem [resolvable:$true] %s33
      %39 = dma.hbm_to_vmem [thread:$0]  %s32, 128, %s34, [#allocation5], 64, 64, 4
    $region9: #{tpu_custom_call.1} parent=1 // pred_fallthru
      _
    // Predicated region
    $region10: #{tpu_custom_call.1} parent=1 // pred_check
      _
    $region11: #{tpu_custom_call.1} parent=1 // pred_check_branch
      %41 = sbr.rel (0) target = $region13
    $region12: #{tpu_custom_call.1} parent=1 // pred_region
      _
    $region13: #{tpu_custom_call.1} parent=1 // pred_fallthru
      _
    // Predicated region
    $region14: #{tpu_custom_call.1} parent=1 // pred_check
      _
    $region15: #{tpu_custom_call.1} parent=1 // pred_check_branch
      %43 = sbr.rel (0) target = $region17
    $region16: #{tpu_custom_call.1} parent=1 // pred_region
      _
    $region17: #{tpu_custom_call.1} parent=1 // pred_fallthru
      _
    // Predicated region
    $region18: #{tpu_custom_call.1} parent=1 // pred_check
      _
    $region19: #{tpu_custom_call.1} parent=1 // pred_check_branch
      %45 = sbr.rel (0) target = $region21
    $region20: #{tpu_custom_call.1} parent=1 // pred_region
      _
    $region21: #{tpu_custom_call.1} parent=1 // pred_fallthru
      _
    // Predicated region
    $region22: #{tpu_custom_call.1} parent=1 // pred_check
      _
    $region23: #{tpu_custom_call.1} parent=1 // pred_check_branch
      %47 = sbr.rel (0) target = $region25
    $region24: #{tpu_custom_call.1} parent=1 // pred_region
      _
    $region25: #{tpu_custom_call.1} parent=1 // pred_fallthru
      _
    // Predicated region
    $region26: #{tpu_custom_call.1} parent=1 // pred_check
      _
    $region27: #{tpu_custom_call.1} parent=1 // pred_check_branch
      %49 = sbr.rel (0) target = $region29
    $region28: #{tpu_custom_call.1} parent=1 // pred_region
      _
    $region29: #{tpu_custom_call.1} parent=1 // pred_fallthru
      _
    // Predicated region
    $region30: #{tpu_custom_call.1} parent=1 // pred_check
      _
    $region31: #{tpu_custom_call.1} parent=1 // pred_check_branch
      %51 = sbr.rel (0) target = $region33
    $region32: #{tpu_custom_call.1} parent=1 // pred_region
      %53 = dma.done [#allocation3], 256
    $region33: #{tpu_custom_call.1} parent=1 // pred_fallthru
      _
    // Predicated region
    $region34: #{tpu_custom_call.1} parent=1 // pred_check
      _
    $region35: #{tpu_custom_call.1} parent=1 // pred_check_branch
      %55 = sbr.rel (0) target = $region37
    $region36: #{tpu_custom_call.1} parent=1 // pred_region
      %57 = dma.done [#allocation5], 128
    $region37: #{tpu_custom_call.1} parent=1 // pred_fallthru
      _
    %v59 = vld [vmem:[#allocation2] sm:$0xff]
    %v60 = vld [vmem:[#allocation2 + $0x8] sm:$0xff]
    %v61 = vpack.c.bf16 %v60, %v59
    %v62 = vld [vmem:[#allocation4] sm:$0xf]
    %v63 = vld [vmem:[#allocation4 + $0x4] sm:$0x7]
    %v64 = vld [vmem:[%s2] sm:$0x1]
    %v66 = vperm.slane %v64, 0
    %v70 = vunpack.c.l.b16 %v62
    %v71 = vunpack.c.l.b16 %v63
    %v72 = vpack.c.b16 %v71, %v70
    %vm73 = vcmask 105472
    %v75 = vsel %vm73, %v61, 0
    %vm77 = vcmask 1045504
    %vm78 = vcmask 1046528
    %v79 = vsel %vm77, 4294967295, 65535
    %v80 = vsel %vm78, %v79, 0
    %v82 = vand.u32 %v72, %v80
    %84 = vmatpush.bf16.msra.mxu0 0
    %85 = vmatpush.bf16.msra.mxu0 0
    %86 = vmatpush.bf16.msra.mxu0 0
    %87 = vmatpush.bf16.msra.mxu0 0
    %88 = vmatpush.bf16.msra.mxu0 0
    %89 = vmatpush.bf16.msra.mxu0 0
    %90 = vmatpush.bf16.msra.mxu0 0
    %91 = vmatpush.bf16.msra.mxu0 %v82
    %92 = vmatmul.bf16.gmra.mxu0 %v75
    %v93 = vpop.f32.mrf.mxu0
    %v94 = vadd.f32 %v66, %v93
    %v95 = vpop.f32.mrf.mxu0
    %v96 = vadd.f32 %v66, %v95
    %97 = vdwg.mxu0
    %v98 = vmax.f32 %v94, 0.0
    %v99 = vmax.f32 %v96, 0.0
    %v100 = vpack.c.bf16 %v99, %v98
    %v101 = vld [vmem:[%s3] sm:$0xf]
    %v102 = vld [vmem:[%s3 + $0x4] sm:$0xf]
    %v103 = vld [vmem:[%s3 + $0x8] sm:$0xf]
    %v104 = vld [vmem:[%s3 + $0xc] sm:$0xf]
    %v105 = vld [vmem:[%s3 + $0x10] sm:$0xf]
    %v106 = vld [vmem:[%s3 + $0x14] sm:$0xf]
    %v107 = vld [vmem:[%s3 + $0x18] sm:$0xf]
    %v108 = vld [vmem:[%s3 + $0x1c] sm:$0xf]
    %v109 = vld [vmem:[%s4] sm:$0x1]
    %v111 = vperm.slane %v109, 0
    %v121 = vunpack.c.l.b16 %v101
    %v122 = vunpack.c.l.b16 %v102
    %v123 = vunpack.c.l.b16 %v103
    %v124 = vunpack.c.l.b16 %v104
    %v125 = vunpack.c.l.b16 %v105
    %v126 = vunpack.c.l.b16 %v106
    %v127 = vunpack.c.l.b16 %v107
    %v128 = vunpack.c.l.b16 %v108
    %v129 = vpack.c.b16 %v122, %v121
    %v130 = vpack.c.b16 %v124, %v123
    %v131 = vpack.c.b16 %v126, %v125
    %v132 = vpack.c.b16 %v128, %v127
    %vm137 = vcmask 523264
    %v139 = vsel %vm137, %v100, 0
    %141 = vmatpush.bf16.msra.mxu0 0
    %142 = vmatpush.bf16.msra.mxu0 0
    %143 = vmatpush.bf16.msra.mxu0 0
    %144 = vmatpush.bf16.msra.mxu0 0
    %145 = vmatpush.bf16.msra.mxu0 %v132
    %146 = vmatpush.bf16.msra.mxu0 %v131
    %147 = vmatpush.bf16.msra.mxu0 %v130
    %148 = vmatpush.bf16.msra.mxu0 %v129
    %149 = vmatmul.bf16.gmra.mxu0 %v139
    %v150 = vpop.f32.mrf.mxu0
    %v151 = vadd.f32 %v111, %v150
    %v152 = vpop.f32.mrf.mxu0
    %v153 = vadd.f32 %v111, %v152
    %154 = vdwg.mxu0
    %v155 = vmax.f32 %v151, 0.0
    %v156 = vmax.f32 %v153, 0.0
    %v157 = vpack.c.bf16 %v156, %v155
    %v158 = vld [vmem:[%s5] sm:$0xf]
    %v159 = vld [vmem:[%s5 + $0x4] sm:$0xf]
    %v160 = vld [vmem:[%s5 + $0x8] sm:$0xf]
    %v161 = vld [vmem:[%s5 + $0xc] sm:$0xf]
    %v162 = vld [vmem:[%s5 + $0x10] sm:$0xf]
    %v163 = vld [vmem:[%s5 + $0x14] sm:$0xf]
    %v164 = vld [vmem:[%s5 + $0x18] sm:$0xf]
    %v165 = vld [vmem:[%s5 + $0x1c] sm:$0xf]
    %v166 = vld [vmem:[%s6] sm:$0x1]
    %v168 = vperm.slane %v166, 0
    %v178 = vunpack.c.l.b16 %v158
    %v179 = vunpack.c.l.b16 %v159
    %v180 = vunpack.c.l.b16 %v160
    %v181 = vunpack.c.l.b16 %v161
    %v182 = vunpack.c.l.b16 %v162
    %v183 = vunpack.c.l.b16 %v163
    %v184 = vunpack.c.l.b16 %v164
    %v185 = vunpack.c.l.b16 %v165
    %v186 = vpack.c.b16 %v179, %v178
    %v187 = vpack.c.b16 %v181, %v180
    %v188 = vpack.c.b16 %v183, %v182
    %v189 = vpack.c.b16 %v185, %v184
    %v195 = vsel %vm137, %v157, 0
    %197 = vmatpush.bf16.msra.mxu0 0
    %198 = vmatpush.bf16.msra.mxu0 0
    %199 = vmatpush.bf16.msra.mxu0 0
    %200 = vmatpush.bf16.msra.mxu0 0
    %201 = vmatpush.bf16.msra.mxu0 %v189
    %202 = vmatpush.bf16.msra.mxu0 %v188
    %203 = vmatpush.bf16.msra.mxu0 %v187
    %204 = vmatpush.bf16.msra.mxu0 %v186
    %205 = vmatmul.bf16.gmra.mxu0 %v195
    %v206 = vpop.f32.mrf.mxu0
    %v207 = vadd.f32 %v168, %v206
    %v208 = vpop.f32.mrf.mxu0
    %v209 = vadd.f32 %v168, %v208
    %210 = vdwg.mxu0
    %vm211 = vcmask 15360
    %212 = vst.msk [vmem:[#allocation6] sm:$0xff] %vm211, %v207
    %213 = vst.msk [vmem:[#allocation6 + $0x8] sm:$0xff] %vm211, %v209
    // Predicated region
    $region38: #{tpu_custom_call.1} parent=1 // pred_check
      _
    $region39: #{tpu_custom_call.1} parent=1 // pred_check_branch
      %215 = sbr.rel (0) target = $region41
    $region40: #{tpu_custom_call.1} parent=1 // pred_region
      // Predicated region
      $region42: #{tpu_custom_call.1} parent=40 // pred_check
        _
      $region43: #{tpu_custom_call.1} parent=40 // pred_check_branch
        %217 = sbr.rel (0) target = $region45
      $region44: #{tpu_custom_call.1} parent=40 // pred_region
        // Predicated region
        $region46: #{tpu_custom_call.1} parent=44 // pred_check
          _
        $region47: #{tpu_custom_call.1} parent=44 // pred_check_branch
          %219 = sbr.rel (0) target = $region49
        $region48: #{tpu_custom_call.1} parent=44 // pred_region
          // Predicated region
          $region61: #{tpu_custom_call.1} parent=48 // pred_check
            _
          $region62: #{tpu_custom_call.1} parent=48 // pred_check_branch
            %235 = sbr.rel (0) target = $region64
          $region63: #{tpu_custom_call.1} parent=48 // pred_region
            loop: start=0, step=1, limit=1
            $region65: #{tpu_custom_call.1} parent=63 // loop_pre_header
              _
            $region66: #{tpu_custom_call.1} parent=63 // loop_header
              %s237 = sphi 0, %s241
              %p238 = scmp.ge.s32.totalorder %s237, 1
              %s242 = sphi [#allocation6], [#allocation6]
              %s243 = sphi %s7, %s7
            $region67: #{tpu_custom_call.1} parent=63 // loop_header_branch
              %240 = sbr.rel (%p238) target = $region71
            $region68: #{tpu_custom_call.1} parent=63 // loop_body
              %v244 = vld [vmem:[%s242] sm:$0xff]
              %245 = vst [vmem:[%s243] sm:$0xff] %v244
            $region69: #{tpu_custom_call.1} parent=63 // loop_footer
              %s241 = sadd.s32 1, %s237
            $region70: #{tpu_custom_call.1} parent=63 // loop_footer_branch
              %236 = sbr.rel target = $region66
            $region71: #{tpu_custom_call.1} parent=63 // loop_exit
              _
          $region64: #{tpu_custom_call.1} parent=48 // pred_fallthru
            _
          // Predicated region
          $region72: #{tpu_custom_call.1} parent=48 // pred_check
            _
          $region73: #{tpu_custom_call.1} parent=48 // pred_check_branch
            %247 = sbr.rel target = $region75
          $region74: #{tpu_custom_call.1} parent=48 // pred_region
            _
          $region75: #{tpu_custom_call.1} parent=48 // pred_fallthru
            _
        $region49: #{tpu_custom_call.1} parent=44 // pred_fallthru
          _
        // Predicated region
        $region50: #{tpu_custom_call.1} parent=44 // pred_check
          _
        $region51: #{tpu_custom_call.1} parent=44 // pred_check_branch
          %221 = sbr.rel target = $region53
        $region52: #{tpu_custom_call.1} parent=44 // pred_region
          %s223 = ssub.s32 256, 1
          loop: start=0, step=1, limit=1
          $region54: #{tpu_custom_call.1} parent=52 // loop_pre_header
            _
          $region55: #{tpu_custom_call.1} parent=52 // loop_header
            %s225 = sphi 0, %s229
            %p226 = scmp.ge.s32.totalorder %s225, 1
            %s230 = sphi [#allocation6], [#allocation6]
            %s231 = sphi %s7, %s7
          $region56: #{tpu_custom_call.1} parent=52 // loop_header_branch
            %228 = sbr.rel (%p226) target = $region60
          $region57: #{tpu_custom_call.1} parent=52 // loop_body
            %v232 = vld [vmem:[%s230] sm:%s223]
            %233 = vst [vmem:[%s231] sm:%s223] %v232
          $region58: #{tpu_custom_call.1} parent=52 // loop_footer
            %s229 = sadd.s32 1, %s225
          $region59: #{tpu_custom_call.1} parent=52 // loop_footer_branch
            %224 = sbr.rel target = $region55
          $region60: #{tpu_custom_call.1} parent=52 // loop_exit
            _
        $region53: #{tpu_custom_call.1} parent=44 // pred_fallthru
          _
      $region45: #{tpu_custom_call.1} parent=40 // pred_fallthru
        _
      %248 = vnop
    $region41: #{tpu_custom_call.1} parent=1 // pred_fallthru
      _
    // Predicated region
    $region76: #{tpu_custom_call.1} parent=1 // pred_check
      _
    $region77: #{tpu_custom_call.1} parent=1 // pred_check_branch
      %250 = sbr.rel (0) target = $region79
    $region78: #{tpu_custom_call.1} parent=1 // pred_region
      _
    $region79: #{tpu_custom_call.1} parent=1 // pred_fallthru
      _
    %251 = vsyncpa [#allocation3], 1
    %252 = vsyncpa [#allocation5], 1

</llo_original>
